<compile_context>
chip_gen: v6e
topology: v6e:2x2x1
jax: 0.10.0
libtpu: 0.0.40
codegen_flags: <defaults>
</compile_context>

<pallas_src>
import jax
import jax.numpy as jnp
from jax.experimental import pallas as pl
from jax.experimental.pallas import tpu as pltpu

# ---- model hyper-parameters (small, consistent with the module) ----
B, L = 2, 16            # batch, sequence length
E = 10                  # embedding_dim (word embedding, Change 1)
F = 32                  # n_filters
KERNEL_SIZES = (3, 5)   # two conv branches
NK = len(KERNEL_SIZES)
C = 8                   # n_classes
VOCAB = 26              # amino-acid vocabulary size
BN_EPS = 1e-3           # BatchNorm1d eps


def deepfam_kernel(tok_ref, emb_ref, w1_ref, b1_ref, w2_ref, b2_ref,
                   wc_ref, bc_ref, o_ref):
    """One invocation: fused embedding + im2col convs + ReLU + maxpool + head for all B."""
    # ---- embedding lookup fused as one-hot(tokens) @ table on the MXU ----
    tok = tok_ref[...]                                            # (B*L, 1) int32
    lane_iota = jax.lax.broadcasted_iota(jnp.int32, (B * L, VOCAB), 1)
    onehot = (tok == lane_iota).astype(jnp.float32)               # (B*L, VOCAB)
    x_all = jnp.dot(onehot, emb_ref[...],
                    preferred_element_type=jnp.float32)           # (B*L, E)

    conv_params = ((KERNEL_SIZES[0], w1_ref, b1_ref),
                   (KERNEL_SIZES[1], w2_ref, b2_ref))

    pooled = [[None] * NK for _ in range(B)]
    for ci, (k, w_ref, b_ref) in enumerate(conv_params):
        l_out = L - k + 1
        # im2col: shifted windows concat'd along lanes, batches stacked along
        # sublanes -> ONE (B*l_out, k*E) @ (k*E, F) matmul per branch.
        patch_rows = []
        for b in range(B):
            x_b = x_all[b * L:(b + 1) * L, :]                     # (L, E)
            patch_rows.append(
                jnp.concatenate([x_b[dk:dk + l_out, :] for dk in range(k)],
                                axis=1))                          # (l_out, k*E)
        patches = jnp.concatenate(patch_rows, axis=0)             # (B*l_out, k*E)
        acc = jnp.dot(patches, w_ref[...],
                      preferred_element_type=jnp.float32)         # (B*l_out, F)
        # BN (eval) scale is folded into w/b at prep time; just bias + ReLU here.
        acc = jnp.maximum(acc + b_ref[...], 0.0)
        for b in range(B):
            pooled[b][ci] = jnp.max(acc[b * l_out:(b + 1) * l_out, :],
                                    axis=0, keepdims=True)        # (1, F)

    # ---- concat + classification head: one (B, NK*F) @ (NK*F, C) matmul ----
    feats = jnp.concatenate(
        [jnp.concatenate(pooled[b], axis=1) for b in range(B)], axis=0)  # (B, NK*F)
    # TODO(synk): Dropout (p=0.3) is identity in eval mode; not implemented stochastically.
    o_ref[...] = jnp.dot(feats, wc_ref[...],
                         preferred_element_type=jnp.float32) + bc_ref[...]


def deepfam_forward(tokens, emb_table, w1_im2col, b1_folded, w2_im2col, b2_folded, wc, bc):
    """tokens: (B, L) int32.  Conv weights pre-reshaped to (k*E, F) with BN folded."""
    tok_col = tokens.reshape(B * L, 1).astype(jnp.int32)
    return pl.pallas_call(
        deepfam_kernel,
        out_shape=jax.ShapeDtypeStruct((B, C), jnp.float32),
        grid=(1,),
        in_specs=[
            pl.BlockSpec((B * L, 1), lambda i: (0, 0)),                    # tokens (column)
            pl.BlockSpec((VOCAB, E), lambda i: (0, 0)),                    # embedding table
            pl.BlockSpec((KERNEL_SIZES[0] * E, F), lambda i: (0, 0)),      # conv1 im2col weight
            pl.BlockSpec((1, F), lambda i: (0, 0)),                        # conv1 folded bias
            pl.BlockSpec((KERNEL_SIZES[1] * E, F), lambda i: (0, 0)),      # conv2 im2col weight
            pl.BlockSpec((1, F), lambda i: (0, 0)),                        # conv2 folded bias
            pl.BlockSpec((NK * F, C), lambda i: (0, 0)),                   # classification weight
            pl.BlockSpec((1, C), lambda i: (0, 0)),                        # classification bias
        ],
        out_specs=pl.BlockSpec((B, C), lambda i: (0, 0)),
        compiler_params=pltpu.CompilerParams(dimension_semantics=("arbitrary",)),
    )(tok_col, emb_table, w1_im2col, b1_folded, w2_im2col, b2_folded, wc, bc)


def reference_forward(tokens, emb_table, w1_kEF, b1, w2_kEF, b2, wc, bc):
    """Pure-JAX reference mirroring the PyTorch forward (eval mode), un-folded params."""
    x_emb = emb_table[tokens]                                     # (B, L, E)
    bn_scale = 1.0 / jnp.sqrt(1.0 + BN_EPS)
    pooled_all = []
    for (k, w, bias) in ((KERNEL_SIZES[0], w1_kEF, b1), (KERNEL_SIZES[1], w2_kEF, b2)):
        l_out = L - k + 1
        acc = jnp.zeros((B, l_out, F), jnp.float32)
        for dk in range(k):
            acc += jnp.einsum("ble,ef->blf", x_emb[:, dk:dk + l_out, :], w[dk])
        acc = acc + bias.reshape(1, 1, F)
        acc = jnp.maximum(acc * bn_scale, 0.0)
        pooled_all.append(jnp.max(acc, axis=1))                   # (B, F)
    feats = jnp.concatenate(pooled_all, axis=1)                   # (B, NK*F)
    return feats @ wc + bc.reshape(1, C)


if __name__ == "__main__":
    key = jax.random.PRNGKey(0)
    k_emb, k_w1, k_w2, k_wc, k_tok = jax.random.split(key, 5)

    # Deterministic synthetic parameters (shapes per the module __init__).
    emb_table = jax.random.normal(k_emb, (VOCAB, E), jnp.float32)           # nn.Embedding(VOCAB, 10)

    def xavier(k, shape, fan_in, fan_out):
        lim = jnp.sqrt(6.0 / (fan_in + fan_out))
        return jax.random.uniform(k, shape, jnp.float32, -lim, lim)

    # Conv1d weights stored as (k, E, F) for the reference; bias = 0.01.
    w1 = xavier(k_w1, (KERNEL_SIZES[0], E, F), E * KERNEL_SIZES[0], F)
    b1 = jnp.full((1, F), 0.01, jnp.float32)
    w2 = xavier(k_w2, (KERNEL_SIZES[1], E, F), E * KERNEL_SIZES[1], F)
    b2 = jnp.full((1, F), 0.01, jnp.float32)
    wc = xavier(k_wc, (F * NK, C), F * NK, C)
    bc = jnp.full((1, C), 0.01, jnp.float32)

    # Kernel-side parameter prep: fold eval-mode BN scale (mean=0, var=1, gamma=1,
    # beta=0 -> 1/sqrt(1+eps)) into conv weights/biases, reshape to im2col layout.
    bn_scale = 1.0 / jnp.sqrt(jnp.float32(1.0 + BN_EPS))
    w1_im2col = (w1 * bn_scale).reshape(KERNEL_SIZES[0] * E, F)
    w2_im2col = (w2 * bn_scale).reshape(KERNEL_SIZES[1] * E, F)
    b1_folded = b1 * bn_scale
    b2_folded = b2 * bn_scale

    # Input: integer token sequences (batch, seq_len).
    tokens = jax.random.randint(k_tok, (B, L), 0, VOCAB, jnp.int32)

    out = deepfam_forward(tokens, emb_table, w1_im2col, b1_folded,
                          w2_im2col, b2_folded, wc, bc)
    out = jax.block_until_ready(out)

    ref = reference_forward(tokens, emb_table, w1, b1, w2, b2, wc, bc)
    assert out.shape == (B, C)
    assert jnp.allclose(out, ref, atol=1e-4, rtol=1e-4), (out, ref)
    print("KERNEL_OK")
</pallas_src>

<mosaic_0001>
module attributes {stable_mosaic.version = 11 : i64} {
  func.func @deepfam_kernel(%arg0: i32, %arg1: memref<32x1xi32, #tpu.memory_space<vmem>>, %arg2: memref<26x10xf32, #tpu.memory_space<vmem>>, %arg3: memref<30x32xf32, #tpu.memory_space<vmem>>, %arg4: memref<1x32xf32, #tpu.memory_space<vmem>>, %arg5: memref<50x32xf32, #tpu.memory_space<vmem>>, %arg6: memref<1x32xf32, #tpu.memory_space<vmem>>, %arg7: memref<64x8xf32, #tpu.memory_space<vmem>>, %arg8: memref<1x8xf32, #tpu.memory_space<vmem>>, %arg9: memref<2x8xf32, #tpu.memory_space<vmem>>) attributes {dimension_semantics = [#tpu.dimension_semantics<arbitrary>], iteration_bounds = array<i64: 1>, scalar_prefetch = 0 : i64, scratch_operands = 0 : i64, tpu.core_type = #tpu.core_type<tc>, window_params = [{pipeline_mode = #tpu.pipeline_mode<synchronous>, transform_indices = @transform_0, window_bounds = array<i64: 32, 1>}, {pipeline_mode = #tpu.pipeline_mode<synchronous>, transform_indices = @transform_1, window_bounds = array<i64: 26, 10>}, {pipeline_mode = #tpu.pipeline_mode<synchronous>, transform_indices = @transform_2, window_bounds = array<i64: 30, 32>}, {pipeline_mode = #tpu.pipeline_mode<synchronous>, transform_indices = @transform_3, window_bounds = array<i64: 1, 32>}, {pipeline_mode = #tpu.pipeline_mode<synchronous>, transform_indices = @transform_4, window_bounds = array<i64: 50, 32>}, {pipeline_mode = #tpu.pipeline_mode<synchronous>, transform_indices = @transform_5, window_bounds = array<i64: 1, 32>}, {pipeline_mode = #tpu.pipeline_mode<synchronous>, transform_indices = @transform_6, window_bounds = array<i64: 64, 8>}, {pipeline_mode = #tpu.pipeline_mode<synchronous>, transform_indices = @transform_7, window_bounds = array<i64: 1, 8>}, {pipeline_mode = #tpu.pipeline_mode<synchronous>, transform_indices = @transform_8, window_bounds = array<i64: 2, 8>}]} {
    %c0 = arith.constant 0 : index
    %c0_0 = arith.constant 0 : index
    %0 = vector.load %arg1[%c0, %c0_0] : memref<32x1xi32, #tpu.memory_space<vmem>>, vector<32x1xi32>
    %1 = tpu.iota {dimensions = array<i32: 1>} : vector<32x26xi32>
    %2 = vector.broadcast %0 : vector<32x1xi32> to vector<32x26xi32>
    %3 = arith.cmpi eq, %2, %1 : vector<32x26xi32>
    %4 = arith.extui %3 : vector<32x26xi1> to vector<32x26xi32>
    %5 = arith.sitofp %4 : vector<32x26xi32> to vector<32x26xf32>
    %c0_1 = arith.constant 0 : index
    %c0_2 = arith.constant 0 : index
    %6 = vector.load %arg2[%c0_1, %c0_2] : memref<26x10xf32, #tpu.memory_space<vmem>>, vector<26x10xf32>
    %cst = arith.constant dense<0.000000e+00> : vector<32x10xf32>
    %7 = tpu.matmul %5, %6, %cst {dimension_numbers = #tpu.dot_dimension_numbers<[1], [0], [0], [1], [0, 0, 1, 1], [], []>} : vector<32x26xf32>, vector<26x10xf32>, vector<32x10xf32> -> vector<32x10xf32>
    %8 = vector.extract_strided_slice %7 {offsets = [0, 0], sizes = [16, 10], strides = [1, 1]} : vector<32x10xf32> to vector<16x10xf32>
    %9 = vector.extract_strided_slice %8 {offsets = [0, 0], sizes = [14, 10], strides = [1, 1]} : vector<16x10xf32> to vector<14x10xf32>
    %10 = vector.extract_strided_slice %8 {offsets = [1, 0], sizes = [14, 10], strides = [1, 1]} : vector<16x10xf32> to vector<14x10xf32>
    %11 = vector.extract_strided_slice %8 {offsets = [2, 0], sizes = [14, 10], strides = [1, 1]} : vector<16x10xf32> to vector<14x10xf32>
    %12 = tpu.concatenate %9, %10, %11 in 1 : vector<14x10xf32>, vector<14x10xf32>, vector<14x10xf32> -> vector<14x30xf32>
    %13 = vector.extract_strided_slice %7 {offsets = [16, 0], sizes = [16, 10], strides = [1, 1]} : vector<32x10xf32> to vector<16x10xf32>
    %14 = vector.extract_strided_slice %13 {offsets = [0, 0], sizes = [14, 10], strides = [1, 1]} : vector<16x10xf32> to vector<14x10xf32>
    %15 = vector.extract_strided_slice %13 {offsets = [1, 0], sizes = [14, 10], strides = [1, 1]} : vector<16x10xf32> to vector<14x10xf32>
    %16 = vector.extract_strided_slice %13 {offsets = [2, 0], sizes = [14, 10], strides = [1, 1]} : vector<16x10xf32> to vector<14x10xf32>
    %17 = tpu.concatenate %14, %15, %16 in 1 : vector<14x10xf32>, vector<14x10xf32>, vector<14x10xf32> -> vector<14x30xf32>
    %18 = tpu.concatenate %12, %17 in 0 : vector<14x30xf32>, vector<14x30xf32> -> vector<28x30xf32>
    %c0_3 = arith.constant 0 : index
    %c0_4 = arith.constant 0 : index
    %19 = vector.load %arg3[%c0_3, %c0_4] : memref<30x32xf32, #tpu.memory_space<vmem>>, vector<30x32xf32>
    %cst_5 = arith.constant dense<0.000000e+00> : vector<28x32xf32>
    %20 = tpu.matmul %18, %19, %cst_5 {dimension_numbers = #tpu.dot_dimension_numbers<[1], [0], [0], [1], [0, 0, 1, 1], [], []>} : vector<28x30xf32>, vector<30x32xf32>, vector<28x32xf32> -> vector<28x32xf32>
    %c0_6 = arith.constant 0 : index
    %c0_7 = arith.constant 0 : index
    %21 = vector.load %arg4[%c0_6, %c0_7] : memref<1x32xf32, #tpu.memory_space<vmem>>, vector<1x32xf32>
    %22 = vector.broadcast %21 : vector<1x32xf32> to vector<28x32xf32>
    %23 = arith.addf %20, %22 : vector<28x32xf32>
    %cst_8 = arith.constant 0.000000e+00 : f32
    %24 = vector.broadcast %cst_8 : f32 to vector<28x32xf32>
    %25 = arith.maximumf %23, %24 : vector<28x32xf32>
    %26 = vector.extract_strided_slice %25 {offsets = [0, 0], sizes = [14, 32], strides = [1, 1]} : vector<28x32xf32> to vector<14x32xf32>
    %cst_9 = arith.constant dense<0xFF800000> : vector<32xf32>
    %27 = vector.multi_reduction <maximumf>, %26, %cst_9 [0] : vector<14x32xf32> to vector<32xf32>
    %28 = vector.shape_cast %27 : vector<32xf32> to vector<1x32xf32>
    %29 = vector.extract_strided_slice %25 {offsets = [14, 0], sizes = [14, 32], strides = [1, 1]} : vector<28x32xf32> to vector<14x32xf32>
    %cst_10 = arith.constant dense<0xFF800000> : vector<32xf32>
    %30 = vector.multi_reduction <maximumf>, %29, %cst_10 [0] : vector<14x32xf32> to vector<32xf32>
    %31 = vector.shape_cast %30 : vector<32xf32> to vector<1x32xf32>
    %32 = vector.extract_strided_slice %7 {offsets = [0, 0], sizes = [16, 10], strides = [1, 1]} : vector<32x10xf32> to vector<16x10xf32>
    %33 = vector.extract_strided_slice %32 {offsets = [0, 0], sizes = [12, 10], strides = [1, 1]} : vector<16x10xf32> to vector<12x10xf32>
    %34 = vector.extract_strided_slice %32 {offsets = [1, 0], sizes = [12, 10], strides = [1, 1]} : vector<16x10xf32> to vector<12x10xf32>
    %35 = vector.extract_strided_slice %32 {offsets = [2, 0], sizes = [12, 10], strides = [1, 1]} : vector<16x10xf32> to vector<12x10xf32>
    %36 = vector.extract_strided_slice %32 {offsets = [3, 0], sizes = [12, 10], strides = [1, 1]} : vector<16x10xf32> to vector<12x10xf32>
    %37 = vector.extract_strided_slice %32 {offsets = [4, 0], sizes = [12, 10], strides = [1, 1]} : vector<16x10xf32> to vector<12x10xf32>
    %38 = tpu.concatenate %33, %34, %35, %36, %37 in 1 : vector<12x10xf32>, vector<12x10xf32>, vector<12x10xf32>, vector<12x10xf32>, vector<12x10xf32> -> vector<12x50xf32>
    %39 = vector.extract_strided_slice %7 {offsets = [16, 0], sizes = [16, 10], strides = [1, 1]} : vector<32x10xf32> to vector<16x10xf32>
    %40 = vector.extract_strided_slice %39 {offsets = [0, 0], sizes = [12, 10], strides = [1, 1]} : vector<16x10xf32> to vector<12x10xf32>
    %41 = vector.extract_strided_slice %39 {offsets = [1, 0], sizes = [12, 10], strides = [1, 1]} : vector<16x10xf32> to vector<12x10xf32>
    %42 = vector.extract_strided_slice %39 {offsets = [2, 0], sizes = [12, 10], strides = [1, 1]} : vector<16x10xf32> to vector<12x10xf32>
    %43 = vector.extract_strided_slice %39 {offsets = [3, 0], sizes = [12, 10], strides = [1, 1]} : vector<16x10xf32> to vector<12x10xf32>
    %44 = vector.extract_strided_slice %39 {offsets = [4, 0], sizes = [12, 10], strides = [1, 1]} : vector<16x10xf32> to vector<12x10xf32>
    %45 = tpu.concatenate %40, %41, %42, %43, %44 in 1 : vector<12x10xf32>, vector<12x10xf32>, vector<12x10xf32>, vector<12x10xf32>, vector<12x10xf32> -> vector<12x50xf32>
    %46 = tpu.concatenate %38, %45 in 0 : vector<12x50xf32>, vector<12x50xf32> -> vector<24x50xf32>
    %c0_11 = arith.constant 0 : index
    %c0_12 = arith.constant 0 : index
    %47 = vector.load %arg5[%c0_11, %c0_12] : memref<50x32xf32, #tpu.memory_space<vmem>>, vector<50x32xf32>
    %cst_13 = arith.constant dense<0.000000e+00> : vector<24x32xf32>
    %48 = tpu.matmul %46, %47, %cst_13 {dimension_numbers = #tpu.dot_dimension_numbers<[1], [0], [0], [1], [0, 0, 1, 1], [], []>} : vector<24x50xf32>, vector<50x32xf32>, vector<24x32xf32> -> vector<24x32xf32>
    %c0_14 = arith.constant 0 : index
    %c0_15 = arith.constant 0 : index
    %49 = vector.load %arg6[%c0_14, %c0_15] : memref<1x32xf32, #tpu.memory_space<vmem>>, vector<1x32xf32>
    %50 = vector.broadcast %49 : vector<1x32xf32> to vector<24x32xf32>
    %51 = arith.addf %48, %50 : vector<24x32xf32>
    %cst_16 = arith.constant 0.000000e+00 : f32
    %52 = vector.broadcast %cst_16 : f32 to vector<24x32xf32>
    %53 = arith.maximumf %51, %52 : vector<24x32xf32>
    %54 = vector.extract_strided_slice %53 {offsets = [0, 0], sizes = [12, 32], strides = [1, 1]} : vector<24x32xf32> to vector<12x32xf32>
    %cst_17 = arith.constant dense<0xFF800000> : vector<32xf32>
    %55 = vector.multi_reduction <maximumf>, %54, %cst_17 [0] : vector<12x32xf32> to vector<32xf32>
    %56 = vector.shape_cast %55 : vector<32xf32> to vector<1x32xf32>
    %57 = vector.extract_strided_slice %53 {offsets = [12, 0], sizes = [12, 32], strides = [1, 1]} : vector<24x32xf32> to vector<12x32xf32>
    %cst_18 = arith.constant dense<0xFF800000> : vector<32xf32>
    %58 = vector.multi_reduction <maximumf>, %57, %cst_18 [0] : vector<12x32xf32> to vector<32xf32>
    %59 = vector.shape_cast %58 : vector<32xf32> to vector<1x32xf32>
    %60 = tpu.concatenate %28, %56 in 1 : vector<1x32xf32>, vector<1x32xf32> -> vector<1x64xf32>
    %61 = tpu.concatenate %31, %59 in 1 : vector<1x32xf32>, vector<1x32xf32> -> vector<1x64xf32>
    %62 = tpu.concatenate %60, %61 in 0 : vector<1x64xf32>, vector<1x64xf32> -> vector<2x64xf32>
    %c0_19 = arith.constant 0 : index
    %c0_20 = arith.constant 0 : index
    %63 = vector.load %arg7[%c0_19, %c0_20] : memref<64x8xf32, #tpu.memory_space<vmem>>, vector<64x8xf32>
    %cst_21 = arith.constant dense<0.000000e+00> : vector<2x8xf32>
    %64 = tpu.matmul %62, %63, %cst_21 {dimension_numbers = #tpu.dot_dimension_numbers<[1], [0], [0], [1], [0, 0, 1, 1], [], []>} : vector<2x64xf32>, vector<64x8xf32>, vector<2x8xf32> -> vector<2x8xf32>
    %c0_22 = arith.constant 0 : index
    %c0_23 = arith.constant 0 : index
    %65 = vector.load %arg8[%c0_22, %c0_23] : memref<1x8xf32, #tpu.memory_space<vmem>>, vector<1x8xf32>
    %66 = vector.broadcast %65 : vector<1x8xf32> to vector<2x8xf32>
    %67 = arith.addf %64, %66 : vector<2x8xf32>
    %c0_24 = arith.constant 0 : index
    %c0_25 = arith.constant 0 : index
    %68 = vector.load %arg9[%c0_24, %c0_25] : memref<2x8xf32, #tpu.memory_space<vmem>>, vector<2x8xf32>
    tpu.vector_store %arg9[%c0_24, %c0_25], %67 {strides = array<i32>} : memref<2x8xf32, #tpu.memory_space<vmem>>, vector<2x8xf32>,
    return
  }
  func.func @transform_0(%arg0: i32) -> (i32, i32) {
    %c0_i32 = arith.constant 0 : i32
    %c0_i32_0 = arith.constant 0 : i32
    %c0_i32_1 = arith.constant 0 : i32
    return %c0_i32, %c0_i32_0 : i32, i32
  }
  func.func @transform_1(%arg0: i32) -> (i32, i32) {
    %c0_i32 = arith.constant 0 : i32
    %c0_i32_0 = arith.constant 0 : i32
    %c0_i32_1 = arith.constant 0 : i32
    return %c0_i32, %c0_i32_0 : i32, i32
  }
  func.func @transform_2(%arg0: i32) -> (i32, i32) {
    %c0_i32 = arith.constant 0 : i32
    %c0_i32_0 = arith.constant 0 : i32
    %c0_i32_1 = arith.constant 0 : i32
    return %c0_i32, %c0_i32_0 : i32, i32
  }
  func.func @transform_3(%arg0: i32) -> (i32, i32) {
    %c0_i32 = arith.constant 0 : i32
    %c0_i32_0 = arith.constant 0 : i32
    %c0_i32_1 = arith.constant 0 : i32
    return %c0_i32, %c0_i32_0 : i32, i32
  }
  func.func @transform_4(%arg0: i32) -> (i32, i32) {
    %c0_i32 = arith.constant 0 : i32
    %c0_i32_0 = arith.constant 0 : i32
    %c0_i32_1 = arith.constant 0 : i32
    return %c0_i32, %c0_i32_0 : i32, i32
  }
  func.func @transform_5(%arg0: i32) -> (i32, i32) {
    %c0_i32 = arith.constant 0 : i32
    %c0_i32_0 = arith.constant 0 : i32
    %c0_i32_1 = arith.constant 0 : i32
    return %c0_i32, %c0_i32_0 : i32, i32
  }
  func.func @transform_6(%arg0: i32) -> (i32, i32) {
    %c0_i32 = arith.constant 0 : i32
    %c0_i32_0 = arith.constant 0 : i32
    %c0_i32_1 = arith.constant 0 : i32
    return %c0_i32, %c0_i32_0 : i32, i32
  }
  func.func @transform_7(%arg0: i32) -> (i32, i32) {
    %c0_i32 = arith.constant 0 : i32
    %c0_i32_0 = arith.constant 0 : i32
    %c0_i32_1 = arith.constant 0 : i32
    return %c0_i32, %c0_i32_0 : i32, i32
  }
  func.func @transform_8(%arg0: i32) -> (i32, i32) {
    %c0_i32 = arith.constant 0 : i32
    %c0_i32_0 = arith.constant 0 : i32
    %c0_i32_1 = arith.constant 0 : i32
    return %c0_i32, %c0_i32_0 : i32, i32
  }
}

</mosaic_0001>

<llo_original>
// kernel: tpu_custom_call.1
$region0: #{tpu_custom_call.1}
  #allocation0 [shape = 'u32[]', space=smem, size = 0x4, offset = 0x4, fixed_abs, tag = 'smem constant byte address 0x4 - core index']
  #allocation1 [shape = 'u32[144,128]{1,0:T(1,128)}', space=vmem, size = 0x12000, scoped, tag = 'internal scratch']
  %s0 = inlined_call_operand.vmem [shape: s32[32,1], index: 0, kind: input, shape index: {}]
  %s1 = inlined_call_operand.vmem [shape: f32[26,10], index: 1, kind: input, shape index: {}]
  %s2 = inlined_call_operand.vmem [shape: f32[30,32], index: 2, kind: input, shape index: {}]
  %s3 = inlined_call_operand.vmem [shape: f32[1,32], index: 3, kind: input, shape index: {}]
  %s4 = inlined_call_operand.vmem [shape: f32[50,32], index: 4, kind: input, shape index: {}]
  %s5 = inlined_call_operand.vmem [shape: f32[1,32], index: 5, kind: input, shape index: {}]
  %s6 = inlined_call_operand.vmem [shape: f32[64,8], index: 6, kind: input, shape index: {}]
  %s7 = inlined_call_operand.vmem [shape: f32[1,8], index: 7, kind: input, shape index: {}]
  %s8 = inlined_call_operand.hbm [shape: f32[2,8], index: 8, kind: output, shape index: {}]
  %s9 = sld [smem:[#allocation0]]
  $region42: #{tpu_custom_call.1} parent=0
    _
  %s11 = ssub.s32 1, %s9
  %s12 = scalar_select 0, %s11, %s9
  $region1: #{tpu_custom_call.1} parent=0
    #allocation2 [shape = 'u8[1024]{0}', space=vmem, size = 0x400, scoped, tag = 'output window, operand 0, single buffered']
    #allocation3 [shape = 's32[1]{0}', space=sflag, size = 0x4, scoped, tag = 'scoped memory for tpu_custom_call.1']
    %13 = vsyncpa [#allocation3], 0
    // Predicated region
    $region2: #{tpu_custom_call.1} parent=1 // pred_check
      _
    $region3: #{tpu_custom_call.1} parent=1 // pred_check_branch
      %15 = sbr.rel (0) target = $region5
    $region4: #{tpu_custom_call.1} parent=1 // pred_region
      _
    $region5: #{tpu_custom_call.1} parent=1 // pred_fallthru
      _
    // Predicated region
    $region6: #{tpu_custom_call.1} parent=1 // pred_check
      _
    $region7: #{tpu_custom_call.1} parent=1 // pred_check_branch
      %17 = sbr.rel (0) target = $region9
    $region8: #{tpu_custom_call.1} parent=1 // pred_region
      _
    $region9: #{tpu_custom_call.1} parent=1 // pred_fallthru
      _
    // Predicated region
    $region10: #{tpu_custom_call.1} parent=1 // pred_check
      _
    $region11: #{tpu_custom_call.1} parent=1 // pred_check_branch
      %19 = sbr.rel (0) target = $region13
    $region12: #{tpu_custom_call.1} parent=1 // pred_region
      _
    $region13: #{tpu_custom_call.1} parent=1 // pred_fallthru
      _
    // Predicated region
    $region14: #{tpu_custom_call.1} parent=1 // pred_check
      _
    $region15: #{tpu_custom_call.1} parent=1 // pred_check_branch
      %21 = sbr.rel (0) target = $region17
    $region16: #{tpu_custom_call.1} parent=1 // pred_region
      _
    $region17: #{tpu_custom_call.1} parent=1 // pred_fallthru
      _
    // Predicated region
    $region18: #{tpu_custom_call.1} parent=1 // pred_check
      _
    $region19: #{tpu_custom_call.1} parent=1 // pred_check_branch
      %23 = sbr.rel (0) target = $region21
    $region20: #{tpu_custom_call.1} parent=1 // pred_region
      _
    $region21: #{tpu_custom_call.1} parent=1 // pred_fallthru
      _
    // Predicated region
    $region22: #{tpu_custom_call.1} parent=1 // pred_check
      _
    $region23: #{tpu_custom_call.1} parent=1 // pred_check_branch
      %25 = sbr.rel (0) target = $region25
    $region24: #{tpu_custom_call.1} parent=1 // pred_region
      _
    $region25: #{tpu_custom_call.1} parent=1 // pred_fallthru
      _
    // Predicated region
    $region26: #{tpu_custom_call.1} parent=1 // pred_check
      _
    $region27: #{tpu_custom_call.1} parent=1 // pred_check_branch
      %27 = sbr.rel (0) target = $region29
    $region28: #{tpu_custom_call.1} parent=1 // pred_region
      _
    $region29: #{tpu_custom_call.1} parent=1 // pred_fallthru
      _
    // Predicated region
    $region30: #{tpu_custom_call.1} parent=1 // pred_check
      _
    $region31: #{tpu_custom_call.1} parent=1 // pred_check_branch
      %29 = sbr.rel (0) target = $region33
    $region32: #{tpu_custom_call.1} parent=1 // pred_region
      _
    $region33: #{tpu_custom_call.1} parent=1 // pred_fallthru
      _
    %v30 = vld [vmem:[%s0] sm:$0xff]
    %v31 = vld [vmem:[%s0 + $0x8] sm:$0xff]
    %v32 = vld [vmem:[%s0 + $0x10] sm:$0xff]
    %v33 = vld [vmem:[%s0 + $0x18] sm:$0xff]
    %v34 = vlaneseq
    %v35 = vand.u32 %v34, 127
    %36 = vset.pattern.permute.xlu0 0
    %37 = vperm.xlu0 %36, %v30
    %v38 = vpop.permute.xlu0 %37
    %39 = vset.pattern.permute.xlu0 0
    %40 = vperm.xlu0 %39, %v31
    %v41 = vpop.permute.xlu0 %40
    %42 = vset.pattern.permute.xlu0 0
    %43 = vperm.xlu0 %42, %v32
    %v44 = vpop.permute.xlu0 %43
    %45 = vset.pattern.permute.xlu0 0
    %46 = vperm.xlu0 %45, %v33
    %v47 = vpop.permute.xlu0 %46
    %vm48 = vcmp.eq.s32.totalorder %v38, %v35
    %vm49 = vcmp.eq.s32.totalorder %v41, %v35
    %vm50 = vcmp.eq.s32.totalorder %v44, %v35
    %vm51 = vcmp.eq.s32.totalorder %v47, %v35
    %v52 = vsel %vm48, 1, 0
    %v53 = vsel %vm49, 1, 0
    %v54 = vsel %vm50, 1, 0
    %v55 = vsel %vm51, 1, 0
    %v56 = vcvt.s32.f32 %v52
    %v57 = vcvt.s32.f32 %v53
    %v58 = vcvt.s32.f32 %v54
    %v59 = vcvt.s32.f32 %v55
    %v60 = vld [vmem:[%s1] sm:$0xff]
    %v61 = vld [vmem:[%s1 + $0x8] sm:$0xff]
    %v62 = vld [vmem:[%s1 + $0x10] sm:$0xff]
    %v63 = vld [vmem:[%s1 + $0x18] sm:$0x3]
    %vm64 = vcmask 211968
    %v66 = vsel %vm64, %v56, 0
    %v69 = vsel %vm64, %v57, 0
    %v72 = vsel %vm64, %v58, 0
    %v75 = vsel %vm64, %v59, 0
    %vm77 = vcmask 1041408
    %v79 = vsel %vm77, %v63, 0
    %81 = vmatprep.subr.mxu0 0.0
    %82 = vmatpush1.msra.mxu0 0.0
    %83 = vmatprep.subr.mxu0 0.0
    %84 = vmatpush1.msra.mxu0 0.0
    %85 = vmatprep.subr.mxu0 0.0
    %86 = vmatpush1.msra.mxu0 0.0
    %87 = vmatprep.subr.mxu0 0.0
    %88 = vmatpush1.msra.mxu0 0.0
    %89 = vmatprep.subr.mxu0 0.0
    %90 = vmatpush1.msra.mxu0 0.0
    %91 = vmatprep.subr.mxu0 0.0
    %92 = vmatpush1.msra.mxu0 0.0
    %93 = vmatprep.subr.mxu0 0.0
    %94 = vmatpush1.msra.mxu0 0.0
    %95 = vmatprep.subr.mxu0 0.0
    %96 = vmatpush1.msra.mxu0 0.0
    %97 = vmatprep.subr.mxu0 0.0
    %98 = vmatpush1.msra.mxu0 0.0
    %99 = vmatprep.subr.mxu0 0.0
    %100 = vmatpush1.msra.mxu0 0.0
    %101 = vmatprep.subr.mxu0 0.0
    %102 = vmatpush1.msra.mxu0 0.0
    %103 = vmatprep.subr.mxu0 0.0
    %104 = vmatpush1.msra.mxu0 0.0
    %105 = vmatprep.subr.mxu0 0.0
    %106 = vmatpush1.msra.mxu0 %v79
    %107 = vmatprep.subr.mxu0 0.0
    %108 = vmatpush1.msra.mxu0 %v62
    %109 = vmatprep.subr.mxu0 0.0
    %110 = vmatpush1.msra.mxu0 %v61
    %111 = vmatprep.subr.mxu0 0.0
    %112 = vmatpush1.msra.mxu0 %v60
    %113 = vmatprep.subr.mxu0 0.0
    %114 = vmatpush2.msra.mxu0 0.0
    %115 = vmatprep.subr.mxu0 0.0
    %116 = vmatpush2.msra.mxu0 0.0
    %117 = vmatprep.subr.mxu0 0.0
    %118 = vmatpush2.msra.mxu0 0.0
    %119 = vmatprep.subr.mxu0 0.0
    %120 = vmatpush2.msra.mxu0 0.0
    %121 = vmatprep.subr.mxu0 0.0
    %122 = vmatpush2.msra.mxu0 0.0
    %123 = vmatprep.subr.mxu0 0.0
    %124 = vmatpush2.msra.mxu0 0.0
    %125 = vmatprep.subr.mxu0 0.0
    %126 = vmatpush2.msra.mxu0 0.0
    %127 = vmatprep.subr.mxu0 0.0
    %128 = vmatpush2.msra.mxu0 0.0
    %129 = vmatprep.subr.mxu0 0.0
    %130 = vmatpush2.msra.mxu0 0.0
    %131 = vmatprep.subr.mxu0 0.0
    %132 = vmatpush2.msra.mxu0 0.0
    %133 = vmatprep.subr.mxu0 0.0
    %134 = vmatpush2.msra.mxu0 0.0
    %135 = vmatprep.subr.mxu0 0.0
    %136 = vmatpush2.msra.mxu0 0.0
    %137 = vmatprep.subr.mxu0 0.0
    %138 = vmatpush2.msra.mxu0 0.0
    %139 = vmatprep.subr.mxu0 0.0
    %140 = vmatpush2.msra.mxu0 0.0
    %141 = vmatprep.subr.mxu0 0.0
    %142 = vmatpush2.msra.mxu0 0.0
    %143 = vmatprep.subr.mxu0 0.0
    %144 = vmatpush2.msra.mxu0 0.0
    %145 = vmatprep.mubr.f32.mxu0 0.0
    %146 = vmatmul.mubr.f32.gmra.mxu0 %v66
    %v147 = vpop.f32.mrf.mxu0
    %v148 = vadd.f32 0.0, %v147
    %v149 = vpop.f32.mrf.mxu0
    %150 = vmatprep.mubr.f32.mxu0 0.0
    %151 = vmatmul.mubr.f32.gmra.mxu0 %v69
    %v152 = vpop.f32.mrf.mxu0
    %v153 = vadd.f32 0.0, %v152
    %v154 = vpop.f32.mrf.mxu0
    %155 = vmatprep.mubr.f32.mxu0 0.0
    %156 = vmatmul.mubr.f32.gmra.mxu0 %v72
    %v157 = vpop.f32.mrf.mxu0
    %v158 = vadd.f32 0.0, %v157
    %v159 = vpop.f32.mrf.mxu0
    %160 = vmatprep.mubr.f32.mxu0 0.0
    %161 = vmatmul.mubr.f32.gmra.mxu0 %v75
    %v162 = vpop.f32.mrf.mxu0
    %v163 = vadd.f32 0.0, %v162
    %v164 = vpop.f32.mrf.mxu0
    %165 = vdwg.mxu0
    %vm168 = vcmask 1046528
    %v169 = vrot.slane %v148, 1
    %v170 = vrot.slane %v153, 1
    %v171 = vsel %vm168, %v169, %v170
    %172 = vrot.lane.b32.xlu0 %v171, 10
    %v173 = vpop.permute.xlu0 %172
    %174 = vrot.lane.b32.xlu0 %v170, 10
    %v175 = vpop.permute.xlu0 %174
    %vm178 = vcmask 1045504
    %v179 = vrot.slane %v148, 2
    %v180 = vrot.slane %v153, 2
    %v181 = vsel %vm178, %v179, %v180
    %182 = vrot.lane.b32.xlu0 %v181, 20
    %v183 = vpop.permute.xlu0 %182
    %184 = vrot.lane.b32.xlu0 %v180, 20
    %v185 = vpop.permute.xlu0 %184
    %vm188 = vcmask 80896
    %v189 = vsel %vm188, %v148, %v173
    %v190 = vsel %vm188, %v153, %v175
    %vm191 = vcmask 162816
    %v192 = vsel %vm191, %v189, %v183
    %v193 = vsel %vm191, %v190, %v185
    %v196 = vrot.slane %v158, 1
    %v197 = vrot.slane %v163, 1
    %v198 = vsel %vm168, %v196, %v197
    %199 = vrot.lane.b32.xlu0 %v198, 10
    %v200 = vpop.permute.xlu0 %199
    %201 = vrot.lane.b32.xlu0 %v197, 10
    %v202 = vpop.permute.xlu0 %201
    %v205 = vrot.slane %v158, 2
    %v206 = vrot.slane %v163, 2
    %v207 = vsel %vm178, %v205, %v206
    %208 = vrot.lane.b32.xlu0 %v207, 20
    %v209 = vpop.permute.xlu0 %208
    %210 = vrot.lane.b32.xlu0 %v206, 20
    %v211 = vpop.permute.xlu0 %210
    %v214 = vsel %vm188, %v158, %v200
    %v215 = vsel %vm188, %v163, %v202
    %v216 = vsel %vm191, %v214, %v209
    %v217 = vsel %vm191, %v215, %v211
    %v220 = vrot.slane %v216, 2
    %v221 = vrot.slane %v217, 2
    %v222 = vsel %vm178, %v220, %v221
    %v224 = vsel %vm178, %v193, %v220
    %v225 = vld [vmem:[%s2] sm:$0xff]
    %v226 = vld [vmem:[%s2 + $0x8] sm:$0xff]
    %v227 = vld [vmem:[%s2 + $0x10] sm:$0xff]
    %v228 = vld [vmem:[%s2 + $0x18] sm:$0x3f]
    %v229 = vld [vmem:[%s3] sm:$0x1]
    %v231 = vlaneseq
    %v232 = vshrl.u32 %v231, 7
    %v233 = vsub.s32 0, %v232
    %v234 = vrot.slane %v229, %v233
    %vm236 = vcmask 244736
    %v238 = vsel %vm236, %v192, 0
    %v241 = vsel %vm236, %v224, 0
    %v243 = vsel %vm236, %v222, 0
    %v245 = vsel %vm236, %v221, 0
    %v248 = vsel %vm178, %v228, 0
    %250 = vmatprep.subr.mxu0 0.0
    %251 = vmatpush1.msra.mxu0 0.0
    %252 = vmatprep.subr.mxu0 0.0
    %253 = vmatpush1.msra.mxu0 0.0
    %254 = vmatprep.subr.mxu0 0.0
    %255 = vmatpush1.msra.mxu0 0.0
    %256 = vmatprep.subr.mxu0 0.0
    %257 = vmatpush1.msra.mxu0 0.0
    %258 = vmatprep.subr.mxu0 0.0
    %259 = vmatpush1.msra.mxu0 0.0
    %260 = vmatprep.subr.mxu0 0.0
    %261 = vmatpush1.msra.mxu0 0.0
    %262 = vmatprep.subr.mxu0 0.0
    %263 = vmatpush1.msra.mxu0 0.0
    %264 = vmatprep.subr.mxu0 0.0
    %265 = vmatpush1.msra.mxu0 0.0
    %266 = vmatprep.subr.mxu0 0.0
    %267 = vmatpush1.msra.mxu0 0.0
    %268 = vmatprep.subr.mxu0 0.0
    %269 = vmatpush1.msra.mxu0 0.0
    %270 = vmatprep.subr.mxu0 0.0
    %271 = vmatpush1.msra.mxu0 0.0
    %272 = vmatprep.subr.mxu0 0.0
    %273 = vmatpush1.msra.mxu0 0.0
    %274 = vmatprep.subr.mxu0 0.0
    %275 = vmatpush1.msra.mxu0 %v248
    %276 = vmatprep.subr.mxu0 0.0
    %277 = vmatpush1.msra.mxu0 %v227
    %278 = vmatprep.subr.mxu0 0.0
    %279 = vmatpush1.msra.mxu0 %v226
    %280 = vmatprep.subr.mxu0 0.0
    %281 = vmatpush1.msra.mxu0 %v225
    %282 = vmatprep.subr.mxu0 0.0
    %283 = vmatpush2.msra.mxu0 0.0
    %284 = vmatprep.subr.mxu0 0.0
    %285 = vmatpush2.msra.mxu0 0.0
    %286 = vmatprep.subr.mxu0 0.0
    %287 = vmatpush2.msra.mxu0 0.0
    %288 = vmatprep.subr.mxu0 0.0
    %289 = vmatpush2.msra.mxu0 0.0
    %290 = vmatprep.subr.mxu0 0.0
    %291 = vmatpush2.msra.mxu0 0.0
    %292 = vmatprep.subr.mxu0 0.0
    %293 = vmatpush2.msra.mxu0 0.0
    %294 = vmatprep.subr.mxu0 0.0
    %295 = vmatpush2.msra.mxu0 0.0
    %296 = vmatprep.subr.mxu0 0.0
    %297 = vmatpush2.msra.mxu0 0.0
    %298 = vmatprep.subr.mxu0 0.0
    %299 = vmatpush2.msra.mxu0 0.0
    %300 = vmatprep.subr.mxu0 0.0
    %301 = vmatpush2.msra.mxu0 0.0
    %302 = vmatprep.subr.mxu0 0.0
    %303 = vmatpush2.msra.mxu0 0.0
    %304 = vmatprep.subr.mxu0 0.0
    %305 = vmatpush2.msra.mxu0 0.0
    %306 = vmatprep.subr.mxu0 0.0
    %307 = vmatpush2.msra.mxu0 0.0
    %308 = vmatprep.subr.mxu0 0.0
    %309 = vmatpush2.msra.mxu0 0.0
    %310 = vmatprep.subr.mxu0 0.0
    %311 = vmatpush2.msra.mxu0 0.0
    %312 = vmatprep.subr.mxu0 0.0
    %313 = vmatpush2.msra.mxu0 0.0
    %314 = vmatprep.mubr.f32.mxu0 0.0
    %315 = vmatmul.mubr.f32.gmra.mxu0 %v238
    %v316 = vpop.f32.mrf.mxu0
    %v317 = vadd.f32 %v234, %v316
    %v318 = vpop.f32.mrf.mxu0
    %319 = vmatprep.mubr.f32.mxu0 0.0
    %320 = vmatmul.mubr.f32.gmra.mxu0 %v241
    %v321 = vpop.f32.mrf.mxu0
    %v322 = vadd.f32 %v234, %v321
    %v323 = vpop.f32.mrf.mxu0
    %324 = vmatprep.mubr.f32.mxu0 0.0
    %325 = vmatmul.mubr.f32.gmra.mxu0 %v243
    %v326 = vpop.f32.mrf.mxu0
    %v327 = vadd.f32 %v234, %v326
    %v328 = vpop.f32.mrf.mxu0
    %329 = vmatprep.mubr.f32.mxu0 0.0
    %330 = vmatmul.mubr.f32.gmra.mxu0 %v245
    %v331 = vpop.f32.mrf.mxu0
    %v332 = vadd.f32 %v234, %v331
    %v333 = vpop.f32.mrf.mxu0
    %334 = vdwg.mxu0
    %v335 = vmax.f32 %v317, 0.0
    %v336 = vmax.f32 %v322, 0.0
    %v337 = vmax.f32 %v327, 0.0
    %v338 = vmax.f32 %v332, 0.0
    %vm339 = vcmask 261120
    %v340 = vsel %vm339, %v335, -inf
    %vm341 = vcmask 259072
    %v342 = vsel %vm341, %v336, -inf
    %v343 = vmax.f32 %v340, %v342
    %v344 = vrot.slane %v343, 4
    %v345 = vmax.f32 %v343, %v344
    %v346 = vrot.slane %v345, 2
    %v347 = vmax.f32 %v345, %v346
    %v348 = vrot.slane %v347, 1
    %v349 = vmax.f32 %v347, %v348
    %vm350 = vcmask 261126
    %v351 = vsel %vm350, %v336, -inf
    %v352 = vsel %vm339, %v337, -inf
    %vm353 = vcmask 257024
    %v354 = vsel %vm353, %v338, -inf
    %v355 = vmax.f32 %v351, %v352
    %v356 = vmax.f32 %v355, %v354
    %v357 = vrot.slane %v356, 4
    %v358 = vmax.f32 %v356, %v357
    %v359 = vrot.slane %v358, 2
    %v360 = vmax.f32 %v358, %v359
    %v361 = vrot.slane %v360, 1
    %v362 = vmax.f32 %v360, %v361
    %vm363 = vcmask 1044480
    %v364 = vrot.slane %v148, 3
    %v365 = vrot.slane %v153, 3
    %v366 = vsel %vm363, %v364, %v365
    %367 = vrot.lane.b32.xlu0 %v366, 30
    %v368 = vpop.permute.xlu0 %367
    %369 = vrot.lane.b32.xlu0 %v365, 30
    %v370 = vpop.permute.xlu0 %369
    %vm373 = vcmask 1043456
    %v374 = vrot.slane %v148, 4
    %v375 = vrot.slane %v153, 4
    %v376 = vsel %vm373, %v374, %v375
    %377 = vrot.lane.b32.xlu0 %v376, 40
    %v378 = vpop.permute.xlu0 %377
    %379 = vrot.lane.b32.xlu0 %v375, 40
    %v380 = vpop.permute.xlu0 %379
    %v383 = vsel %vm236, %v192, %v368
    %v384 = vsel %vm236, %v193, %v370
    %vm385 = vcmask 326656
    %v386 = vsel %vm385, %v383, %v378
    %v387 = vsel %vm385, %v384, %v380
    %v388 = vrot.slane %v158, 3
    %v389 = vrot.slane %v163, 3
    %v390 = vsel %vm363, %v388, %v389
    %391 = vrot.lane.b32.xlu0 %v390, 30
    %v392 = vpop.permute.xlu0 %391
    %393 = vrot.lane.b32.xlu0 %v389, 30
    %v394 = vpop.permute.xlu0 %393
    %v397 = vrot.slane %v158, 4
    %v398 = vrot.slane %v163, 4
    %v399 = vsel %vm373, %v397, %v398
    %400 = vrot.lane.b32.xlu0 %v399, 40
    %v401 = vpop.permute.xlu0 %400
    %402 = vrot.lane.b32.xlu0 %v398, 40
    %v403 = vpop.permute.xlu0 %402
    %v406 = vsel %vm236, %v216, %v392
    %v407 = vsel %vm236, %v217, %v394
    %v408 = vsel %vm385, %v406, %v401
    %v409 = vsel %vm385, %v407, %v403
    %v412 = vrot.slane %v408, 4
    %v413 = vrot.slane %v409, 4
    %v414 = vsel %vm373, %v412, %v413
    %v416 = vsel %vm373, %v387, %v412
    %v417 = vld [vmem:[%s4] sm:$0xff]
    %v418 = vld [vmem:[%s4 + $0x8] sm:$0xff]
    %v419 = vld [vmem:[%s4 + $0x10] sm:$0xff]
    %v420 = vld [vmem:[%s4 + $0x18] sm:$0xff]
    %v421 = vld [vmem:[%s4 + $0x20] sm:$0xff]
    %v422 = vld [vmem:[%s4 + $0x28] sm:$0xff]
    %v423 = vld [vmem:[%s4 + $0x30] sm:$0x3]
    %v424 = vld [vmem:[%s5] sm:$0x1]
    %v426 = vlaneseq
    %v427 = vshrl.u32 %v426, 7
    %v428 = vsub.s32 0, %v427
    %v429 = vrot.slane %v424, %v428
    %vm431 = vcmask 408576
    %v433 = vsel %vm431, %v386, 0
    %v436 = vsel %vm431, %v416, 0
    %v438 = vsel %vm431, %v414, 0
    %v441 = vsel %vm77, %v423, 0
    %443 = vmatprep.subr.mxu0 0.0
    %444 = vmatpush1.msra.mxu0 0.0
    %445 = vmatprep.subr.mxu0 0.0
    %446 = vmatpush1.msra.mxu0 0.0
    %447 = vmatprep.subr.mxu0 0.0
    %448 = vmatpush1.msra.mxu0 0.0
    %449 = vmatprep.subr.mxu0 0.0
    %450 = vmatpush1.msra.mxu0 0.0
    %451 = vmatprep.subr.mxu0 0.0
    %452 = vmatpush1.msra.mxu0 0.0
    %453 = vmatprep.subr.mxu0 0.0
    %454 = vmatpush1.msra.mxu0 0.0
    %455 = vmatprep.subr.mxu0 0.0
    %456 = vmatpush1.msra.mxu0 0.0
    %457 = vmatprep.subr.mxu0 0.0
    %458 = vmatpush1.msra.mxu0 0.0
    %459 = vmatprep.subr.mxu0 0.0
    %460 = vmatpush1.msra.mxu0 0.0
    %461 = vmatprep.subr.mxu0 0.0
    %462 = vmatpush1.msra.mxu0 %v441
    %463 = vmatprep.subr.mxu0 0.0
    %464 = vmatpush1.msra.mxu0 %v422
    %465 = vmatprep.subr.mxu0 0.0
    %466 = vmatpush1.msra.mxu0 %v421
    %467 = vmatprep.subr.mxu0 0.0
    %468 = vmatpush1.msra.mxu0 %v420
    %469 = vmatprep.subr.mxu0 0.0
    %470 = vmatpush1.msra.mxu0 %v419
    %471 = vmatprep.subr.mxu0 0.0
    %472 = vmatpush1.msra.mxu0 %v418
    %473 = vmatprep.subr.mxu0 0.0
    %474 = vmatpush1.msra.mxu0 %v417
    %475 = vmatprep.subr.mxu0 0.0
    %476 = vmatpush2.msra.mxu0 0.0
    %477 = vmatprep.subr.mxu0 0.0
    %478 = vmatpush2.msra.mxu0 0.0
    %479 = vmatprep.subr.mxu0 0.0
    %480 = vmatpush2.msra.mxu0 0.0
    %481 = vmatprep.subr.mxu0 0.0
    %482 = vmatpush2.msra.mxu0 0.0
    %483 = vmatprep.subr.mxu0 0.0
    %484 = vmatpush2.msra.mxu0 0.0
    %485 = vmatprep.subr.mxu0 0.0
    %486 = vmatpush2.msra.mxu0 0.0
    %487 = vmatprep.subr.mxu0 0.0
    %488 = vmatpush2.msra.mxu0 0.0
    %489 = vmatprep.subr.mxu0 0.0
    %490 = vmatpush2.msra.mxu0 0.0
    %491 = vmatprep.subr.mxu0 0.0
    %492 = vmatpush2.msra.mxu0 0.0
    %493 = vmatprep.subr.mxu0 0.0
    %494 = vmatpush2.msra.mxu0 0.0
    %495 = vmatprep.subr.mxu0 0.0
    %496 = vmatpush2.msra.mxu0 0.0
    %497 = vmatprep.subr.mxu0 0.0
    %498 = vmatpush2.msra.mxu0 0.0
    %499 = vmatprep.subr.mxu0 0.0
    %500 = vmatpush2.msra.mxu0 0.0
    %501 = vmatprep.subr.mxu0 0.0
    %502 = vmatpush2.msra.mxu0 0.0
    %503 = vmatprep.subr.mxu0 0.0
    %504 = vmatpush2.msra.mxu0 0.0
    %505 = vmatprep.subr.mxu0 0.0
    %506 = vmatpush2.msra.mxu0 0.0
    %507 = vmatprep.mubr.f32.mxu0 0.0
    %508 = vmatmul.mubr.f32.gmra.mxu0 %v433
    %v509 = vpop.f32.mrf.mxu0
    %v510 = vadd.f32 %v429, %v509
    %v511 = vpop.f32.mrf.mxu0
    %512 = vmatprep.mubr.f32.mxu0 0.0
    %513 = vmatmul.mubr.f32.gmra.mxu0 %v436
    %v514 = vpop.f32.mrf.mxu0
    %v515 = vadd.f32 %v429, %v514
    %v516 = vpop.f32.mrf.mxu0
    %517 = vmatprep.mubr.f32.mxu0 0.0
    %518 = vmatmul.mubr.f32.gmra.mxu0 %v438
    %v519 = vpop.f32.mrf.mxu0
    %v520 = vadd.f32 %v429, %v519
    %v521 = vpop.f32.mrf.mxu0
    %522 = vdwg.mxu0
    %v523 = vmax.f32 %v510, 0.0
    %v524 = vmax.f32 %v515, 0.0
    %v525 = vmax.f32 %v520, 0.0
    %v526 = vsel %vm339, %v523, -inf
    %v527 = vsel %vm353, %v524, -inf
    %v528 = vmax.f32 %v526, %v527
    %v529 = vrot.slane %v528, 4
    %v530 = vmax.f32 %v528, %v529
    %v531 = vrot.slane %v530, 2
    %v532 = vmax.f32 %v530, %v531
    %v533 = vrot.slane %v532, 1
    %v534 = vmax.f32 %v532, %v533
    %vm535 = vcmask 261124
    %v536 = vsel %vm535, %v524, -inf
    %v537 = vsel %vm339, %v525, -inf
    %v538 = vmax.f32 %v536, %v537
    %v539 = vrot.slane %v538, 4
    %v540 = vmax.f32 %v538, %v539
    %v541 = vrot.slane %v540, 2
    %v542 = vmax.f32 %v540, %v541
    %v543 = vrot.slane %v542, 1
    %v544 = vmax.f32 %v542, %v543
    %546 = vrot.lane.b32.xlu0 %v534, 32
    %v547 = vpop.permute.xlu0 %546
    %v549 = vsel %vm339, %v349, %v547
    %551 = vrot.lane.b32.xlu0 %v544, 32
    %v552 = vpop.permute.xlu0 %551
    %v554 = vsel %vm339, %v362, %v552
    %v556 = vrot.slane %v554, 7
    %vm558 = vcmask 1040384
    %v559 = vsel %vm558, %v549, %v556
    %v560 = vld [vmem:[%s6] sm:$0xff]
    %v561 = vld [vmem:[%s6 + $0x8] sm:$0xff]
    %v562 = vld [vmem:[%s6 + $0x10] sm:$0xff]
    %v563 = vld [vmem:[%s6 + $0x18] sm:$0xff]
    %v564 = vld [vmem:[%s6 + $0x20] sm:$0xff]
    %v565 = vld [vmem:[%s6 + $0x28] sm:$0xff]
    %v566 = vld [vmem:[%s6 + $0x30] sm:$0xff]
    %v567 = vld [vmem:[%s6 + $0x38] sm:$0xff]
    %v568 = vld [vmem:[%s7] sm:$0x1]
    %v570 = vlaneseq
    %v571 = vshrl.u32 %v570, 7
    %v572 = vsub.s32 0, %v571
    %v573 = vrot.slane %v568, %v572
    %vm575 = vcmask 523264
    %v577 = vsel %vm575, %v559, 0
    %579 = vmatprep.subr.mxu0 0.0
    %580 = vmatpush1.msra.mxu0 0.0
    %581 = vmatprep.subr.mxu0 0.0
    %582 = vmatpush1.msra.mxu0 0.0
    %583 = vmatprep.subr.mxu0 0.0
    %584 = vmatpush1.msra.mxu0 0.0
    %585 = vmatprep.subr.mxu0 0.0
    %586 = vmatpush1.msra.mxu0 0.0
    %587 = vmatprep.subr.mxu0 0.0
    %588 = vmatpush1.msra.mxu0 0.0
    %589 = vmatprep.subr.mxu0 0.0
    %590 = vmatpush1.msra.mxu0 0.0
    %591 = vmatprep.subr.mxu0 0.0
    %592 = vmatpush1.msra.mxu0 0.0
    %593 = vmatprep.subr.mxu0 0.0
    %594 = vmatpush1.msra.mxu0 0.0
    %595 = vmatprep.subr.mxu0 0.0
    %596 = vmatpush1.msra.mxu0 %v567
    %597 = vmatprep.subr.mxu0 0.0
    %598 = vmatpush1.msra.mxu0 %v566
    %599 = vmatprep.subr.mxu0 0.0
    %600 = vmatpush1.msra.mxu0 %v565
    %601 = vmatprep.subr.mxu0 0.0
    %602 = vmatpush1.msra.mxu0 %v564
    %603 = vmatprep.subr.mxu0 0.0
    %604 = vmatpush1.msra.mxu0 %v563
    %605 = vmatprep.subr.mxu0 0.0
    %606 = vmatpush1.msra.mxu0 %v562
    %607 = vmatprep.subr.mxu0 0.0
    %608 = vmatpush1.msra.mxu0 %v561
    %609 = vmatprep.subr.mxu0 0.0
    %610 = vmatpush1.msra.mxu0 %v560
    %611 = vmatprep.subr.mxu0 0.0
    %612 = vmatpush2.msra.mxu0 0.0
    %613 = vmatprep.subr.mxu0 0.0
    %614 = vmatpush2.msra.mxu0 0.0
    %615 = vmatprep.subr.mxu0 0.0
    %616 = vmatpush2.msra.mxu0 0.0
    %617 = vmatprep.subr.mxu0 0.0
    %618 = vmatpush2.msra.mxu0 0.0
    %619 = vmatprep.subr.mxu0 0.0
    %620 = vmatpush2.msra.mxu0 0.0
    %621 = vmatprep.subr.mxu0 0.0
    %622 = vmatpush2.msra.mxu0 0.0
    %623 = vmatprep.subr.mxu0 0.0
    %624 = vmatpush2.msra.mxu0 0.0
    %625 = vmatprep.subr.mxu0 0.0
    %626 = vmatpush2.msra.mxu0 0.0
    %627 = vmatprep.subr.mxu0 0.0
    %628 = vmatpush2.msra.mxu0 0.0
    %629 = vmatprep.subr.mxu0 0.0
    %630 = vmatpush2.msra.mxu0 0.0
    %631 = vmatprep.subr.mxu0 0.0
    %632 = vmatpush2.msra.mxu0 0.0
    %633 = vmatprep.subr.mxu0 0.0
    %634 = vmatpush2.msra.mxu0 0.0
    %635 = vmatprep.subr.mxu0 0.0
    %636 = vmatpush2.msra.mxu0 0.0
    %637 = vmatprep.subr.mxu0 0.0
    %638 = vmatpush2.msra.mxu0 0.0
    %639 = vmatprep.subr.mxu0 0.0
    %640 = vmatpush2.msra.mxu0 0.0
    %641 = vmatprep.subr.mxu0 0.0
    %642 = vmatpush2.msra.mxu0 0.0
    %643 = vmatprep.mubr.f32.mxu0 0.0
    %644 = vmatmul.mubr.f32.gmra.mxu0 %v577
    %v645 = vpop.f32.mrf.mxu0
    %v646 = vadd.f32 %v573, %v645
    %v647 = vpop.f32.mrf.mxu0
    %648 = vdwg.mxu0
    %vm649 = vcmask 58368
    %650 = vst.msk [vmem:[#allocation2] sm:$0x3] %vm649, %v646
    // Predicated region
    $region34: #{tpu_custom_call.1} parent=1 // pred_check
      _
    $region35: #{tpu_custom_call.1} parent=1 // pred_check_branch
      %652 = sbr.rel (0) target = $region37
    $region36: #{tpu_custom_call.1} parent=1 // pred_region
      %s654 = ssub.s32 32, 32
      %655 = vsyncadd [#allocation3], %s654
      %s657 = sshll.u32 [#allocation2], 4
      %s658 = int_to_ptr.vmem [resolvable:$true] %s657
      %660 = dma.vmem_to_hbm [thread:$0]  %s658, 32, %s8, [#allocation3]
    $region37: #{tpu_custom_call.1} parent=1 // pred_fallthru
      _
    // Predicated region
    $region38: #{tpu_custom_call.1} parent=1 // pred_check
      _
    $region39: #{tpu_custom_call.1} parent=1 // pred_check_branch
      %662 = sbr.rel (0) target = $region41
    $region40: #{tpu_custom_call.1} parent=1 // pred_region
      %663 = dma.done [#allocation3], 32
    $region41: #{tpu_custom_call.1} parent=1 // pred_fallthru
      _
    %664 = vsyncpa [#allocation3], 1

</llo_original>
